<compile_context>
chip_gen: v5e
topology: v5e:2x2
jax: 0.10.0
libtpu: 0.0.40
codegen_flags: <defaults>
</compile_context>

<pallas_src>
import jax
import jax.numpy as jnp
from jax.experimental import pallas as pl
from jax.experimental.pallas import tpu as pltpu


def conv1x1_pad1_tanh_kernel(x_ref, w_ref, b_ref, o_ref):
    # x_ref: (Cin, H, W)      one image, channels-first (native NCHW slice)
    # w_ref: (Cout, Cin)      squeezed 1x1 conv weights
    # b_ref: (Cout, 1)        bias
    # o_ref: (Cout, H+2, W+2) padded output for this image
    Cin, H, W = x_ref.shape
    Cout, Hp, Wp = o_ref.shape

    b3 = b_ref[...][:, :, None]                       # (Cout, 1, 1)

    # padding=1 with a 1x1 kernel: every border pixel sees only the bias.
    o_ref[...] = jnp.broadcast_to(jnp.tanh(b3), (Cout, Hp, Wp))

    # Interior: 1x1 conv == Cin-term multiply-add on the VPU (MXU skipped:
    # a (·,3)x(3,20) matmul would waste >99% of the systolic array).
    x = x_ref[...]                                    # (Cin, H, W)
    w = w_ref[...]                                    # (Cout, Cin)
    acc = jnp.broadcast_to(b3, (Cout, H, W))
    for ci in range(Cin):                             # Cin == 3, fully unrolled
        acc = acc + w[:, ci:ci + 1, None] * x[ci]     # (Cout,1,1)*(H,W)
    o_ref[:, 1:H + 1, 1:W + 1] = jnp.tanh(acc)        # tanh on the EUP


def conv1x1_pad1_tanh(x_nchw, weight, bias):
    """Equivalent of tanh(Conv2d(Cin, Cout, 1, stride=1, padding=1)(x)).

    x_nchw: (N, Cin, H, W) float32
    weight: (Cout, Cin)    float32  (1x1 kernel, squeezed)
    bias:   (Cout,)        float32
    returns (N, Cout, H+2, W+2) float32
    """
    N, Cin, H, W = x_nchw.shape
    Cout = weight.shape[0]
    Hp, Wp = H + 2, W + 2

    w = weight.astype(jnp.float32)                    # (Cout, Cin)  ~tiny
    b = bias.astype(jnp.float32).reshape(Cout, 1)     # (Cout, 1)    ~tiny

    return pl.pallas_call(
        conv1x1_pad1_tanh_kernel,
        out_shape=jax.ShapeDtypeStruct((N, Cout, Hp, Wp), jnp.float32),
        grid_spec=pltpu.PrefetchScalarGridSpec(
            num_scalar_prefetch=0,
            grid=(N,),  # one image per step; >=2 steps keeps both v7x TCs busy
            in_specs=[
                pl.BlockSpec((None, Cin, H, W), lambda n: (n, 0, 0, 0)),
                pl.BlockSpec((Cout, Cin), lambda n: (0, 0)),
                pl.BlockSpec((Cout, 1), lambda n: (0, 0)),
            ],
            out_specs=pl.BlockSpec((None, Cout, Hp, Wp), lambda n: (n, 0, 0, 0)),
        ),
        compiler_params=pltpu.CompilerParams(
            dimension_semantics=("parallel",),
            # per-image blocks (in + padded out, double-buffered) stay well
            # under this on every listed generation, incl. 224x224 inputs
            vmem_limit_bytes=32 * 1024 * 1024,
        ),
    )(x_nchw.astype(jnp.float32), w, b)


def reference(x_nchw, weight, bias):
    x_pad = jnp.pad(x_nchw, ((0, 0), (0, 0), (1, 1), (1, 1)))
    y = jnp.einsum("nchw,oc->nohw", x_pad, weight) + bias[None, :, None, None]
    return jnp.tanh(y)


if __name__ == "__main__":
    key = jax.random.PRNGKey(0)
    k_x, k_w, k_b = jax.random.split(key, 3)

    # Small shapes consistent with the module: Conv2d(3, 20, 1, padding=1)
    N, Cin, H, W = 2, 3, 16, 16
    Cout = 20

    x = jax.random.normal(k_x, (N, Cin, H, W), dtype=jnp.float32)
    bound = 1.0 / (Cin ** 0.5)
    weight = jax.random.uniform(k_w, (Cout, Cin), minval=-bound, maxval=bound,
                                dtype=jnp.float32)
    bias = jax.random.uniform(k_b, (Cout,), minval=-bound, maxval=bound,
                              dtype=jnp.float32)

    out = jax.block_until_ready(conv1x1_pad1_tanh(x, weight, bias))

    ref = reference(x, weight, bias)
    assert out.shape == (N, Cout, H + 2, W + 2), out.shape
    assert jnp.allclose(out, ref, atol=1e-5, rtol=1e-5), \
        float(jnp.max(jnp.abs(out - ref)))

    print("KERNEL_OK")
</pallas_src>

<mosaic_0001>
module attributes {stable_mosaic.version = 11 : i64} {
  func.func @conv1x1_pad1_tanh_kernel(%arg0: i32, %arg1: memref<1x3x16x16xf32, #tpu.memory_space<vmem>>, %arg2: memref<20x3xf32, #tpu.memory_space<vmem>>, %arg3: memref<20x1xf32, #tpu.memory_space<vmem>>, %arg4: memref<1x20x18x18xf32, #tpu.memory_space<vmem>>) attributes {dimension_semantics = [#tpu.dimension_semantics<parallel>], iteration_bounds = array<i64: 2>, scalar_prefetch = 0 : i64, scratch_operands = 0 : i64, tpu.core_type = #tpu.core_type<tc>, window_params = [{transform_indices = @transform_0, window_bounds = array<i64: 1, 3, 16, 16>}, {pipeline_mode = #tpu.pipeline_mode<synchronous>, transform_indices = @transform_1, window_bounds = array<i64: 20, 3>}, {pipeline_mode = #tpu.pipeline_mode<synchronous>, transform_indices = @transform_2, window_bounds = array<i64: 20, 1>}, {transform_indices = @transform_3, window_bounds = array<i64: 1, 20, 18, 18>}]} {
    %c0 = arith.constant 0 : index
    %c0_0 = arith.constant 0 : index
    %0 = vector.load %arg3[%c0, %c0_0] : memref<20x1xf32, #tpu.memory_space<vmem>>, vector<20x1xf32>
    %1 = vector.shape_cast %0 : vector<20x1xf32> to vector<20x1x1xf32>
    %2 = math.tanh %1 : vector<20x1x1xf32>
    %3 = vector.shape_cast %2 : vector<20x1x1xf32> to vector<20x1x1xf32>
    %4 = vector.broadcast %3 : vector<20x1x1xf32> to vector<20x18x18xf32>
    %c0_1 = arith.constant 0 : index
    %c0_2 = arith.constant 0 : index
    %c0_3 = arith.constant 0 : index
    %c0_4 = arith.constant 0 : index
    %5 = vector.load %arg4[%c0_1, %c0_2, %c0_3, %c0_4] : memref<1x20x18x18xf32, #tpu.memory_space<vmem>>, vector<1x20x18x18xf32>
    %6 = vector.shape_cast %5 : vector<1x20x18x18xf32> to vector<20x18x18xf32>
    %7 = vector.shape_cast %4 : vector<20x18x18xf32> to vector<1x20x18x18xf32>
    tpu.vector_store %arg4[%c0_1, %c0_2, %c0_3, %c0_4], %7 {strides = array<i32>} : memref<1x20x18x18xf32, #tpu.memory_space<vmem>>, vector<1x20x18x18xf32>,
    %c0_5 = arith.constant 0 : index
    %c0_6 = arith.constant 0 : index
    %c0_7 = arith.constant 0 : index
    %c0_8 = arith.constant 0 : index
    %8 = vector.load %arg1[%c0_5, %c0_6, %c0_7, %c0_8] : memref<1x3x16x16xf32, #tpu.memory_space<vmem>>, vector<1x3x16x16xf32>
    %9 = vector.shape_cast %8 : vector<1x3x16x16xf32> to vector<3x16x16xf32>
    %c0_9 = arith.constant 0 : index
    %c0_10 = arith.constant 0 : index
    %10 = vector.load %arg2[%c0_9, %c0_10] : memref<20x3xf32, #tpu.memory_space<vmem>>, vector<20x3xf32>
    %11 = vector.shape_cast %1 : vector<20x1x1xf32> to vector<20x1x1xf32>
    %12 = vector.broadcast %11 : vector<20x1x1xf32> to vector<20x16x16xf32>
    %13 = vector.extract_strided_slice %10 {offsets = [0, 0], sizes = [20, 1], strides = [1, 1]} : vector<20x3xf32> to vector<20x1xf32>
    %14 = vector.shape_cast %13 : vector<20x1xf32> to vector<20x1x1xf32>
    %15 = vector.extract_strided_slice %9 {offsets = [0, 0, 0], sizes = [1, 16, 16], strides = [1, 1, 1]} : vector<3x16x16xf32> to vector<1x16x16xf32>
    %16 = vector.shape_cast %15 : vector<1x16x16xf32> to vector<16x16xf32>
    %17 = vector.shape_cast %16 : vector<16x16xf32> to vector<1x16x16xf32>
    %18 = vector.broadcast %14 : vector<20x1x1xf32> to vector<20x16x16xf32>
    %19 = vector.broadcast %17 : vector<1x16x16xf32> to vector<20x16x16xf32>
    %20 = arith.mulf %18, %19 : vector<20x16x16xf32>
    %21 = arith.addf %12, %20 : vector<20x16x16xf32>
    %22 = vector.extract_strided_slice %10 {offsets = [0, 1], sizes = [20, 1], strides = [1, 1]} : vector<20x3xf32> to vector<20x1xf32>
    %23 = vector.shape_cast %22 : vector<20x1xf32> to vector<20x1x1xf32>
    %24 = vector.extract_strided_slice %9 {offsets = [1, 0, 0], sizes = [1, 16, 16], strides = [1, 1, 1]} : vector<3x16x16xf32> to vector<1x16x16xf32>
    %25 = vector.shape_cast %24 : vector<1x16x16xf32> to vector<16x16xf32>
    %26 = vector.shape_cast %25 : vector<16x16xf32> to vector<1x16x16xf32>
    %27 = vector.broadcast %23 : vector<20x1x1xf32> to vector<20x16x16xf32>
    %28 = vector.broadcast %26 : vector<1x16x16xf32> to vector<20x16x16xf32>
    %29 = arith.mulf %27, %28 : vector<20x16x16xf32>
    %30 = arith.addf %21, %29 : vector<20x16x16xf32>
    %31 = vector.extract_strided_slice %10 {offsets = [0, 2], sizes = [20, 1], strides = [1, 1]} : vector<20x3xf32> to vector<20x1xf32>
    %32 = vector.shape_cast %31 : vector<20x1xf32> to vector<20x1x1xf32>
    %33 = vector.extract_strided_slice %9 {offsets = [2, 0, 0], sizes = [1, 16, 16], strides = [1, 1, 1]} : vector<3x16x16xf32> to vector<1x16x16xf32>
    %34 = vector.shape_cast %33 : vector<1x16x16xf32> to vector<16x16xf32>
    %35 = vector.shape_cast %34 : vector<16x16xf32> to vector<1x16x16xf32>
    %36 = vector.broadcast %32 : vector<20x1x1xf32> to vector<20x16x16xf32>
    %37 = vector.broadcast %35 : vector<1x16x16xf32> to vector<20x16x16xf32>
    %38 = arith.mulf %36, %37 : vector<20x16x16xf32>
    %39 = arith.addf %30, %38 : vector<20x16x16xf32>
    %40 = math.tanh %39 : vector<20x16x16xf32>
    %c0_11 = arith.constant 0 : index
    %c0_12 = arith.constant 0 : index
    %c1 = arith.constant 1 : index
    %c1_13 = arith.constant 1 : index
    %41 = vector.load %arg4[%c0_11, %c0_12, %c1, %c1_13] : memref<1x20x18x18xf32, #tpu.memory_space<vmem>>, vector<1x20x16x16xf32>
    %42 = vector.shape_cast %41 : vector<1x20x16x16xf32> to vector<20x16x16xf32>
    %43 = vector.shape_cast %40 : vector<20x16x16xf32> to vector<1x20x16x16xf32>
    tpu.vector_store %arg4[%c0_11, %c0_12, %c1, %c1_13], %43 {strides = array<i32>} : memref<1x20x18x18xf32, #tpu.memory_space<vmem>>, vector<1x20x16x16xf32>,
    return
  }
  func.func @transform_0(%arg0: i32) -> (i32, i32, i32, i32) {
    %c0_i32 = arith.constant 0 : i32
    %c0_i32_0 = arith.constant 0 : i32
    %c0_i32_1 = arith.constant 0 : i32
    %c0_i32_2 = arith.constant 0 : i32
    return %arg0, %c0_i32, %c0_i32_0, %c0_i32_1 : i32, i32, i32, i32
  }
  func.func @transform_1(%arg0: i32) -> (i32, i32) {
    %c0_i32 = arith.constant 0 : i32
    %c0_i32_0 = arith.constant 0 : i32
    %c0_i32_1 = arith.constant 0 : i32
    return %c0_i32, %c0_i32_0 : i32, i32
  }
  func.func @transform_2(%arg0: i32) -> (i32, i32) {
    %c0_i32 = arith.constant 0 : i32
    %c0_i32_0 = arith.constant 0 : i32
    %c0_i32_1 = arith.constant 0 : i32
    return %c0_i32, %c0_i32_0 : i32, i32
  }
  func.func @transform_3(%arg0: i32) -> (i32, i32, i32, i32) {
    %c0_i32 = arith.constant 0 : i32
    %c0_i32_0 = arith.constant 0 : i32
    %c0_i32_1 = arith.constant 0 : i32
    %c0_i32_2 = arith.constant 0 : i32
    return %arg0, %c0_i32, %c0_i32_0, %c0_i32_1 : i32, i32, i32, i32
  }
}

</mosaic_0001>

<llo_original>
// kernel: tpu_custom_call.1
$region0: #{tpu_custom_call.1}
  #allocation0 [shape = 'u32[]', space=smem, size = 0x4, offset = 0x4, fixed_abs, tag = 'smem constant byte address 0x4 - core index']
  #allocation1 [shape = 'u32[72,128]{1,0:T(1,128)}', space=vmem, size = 0x9000, scoped, tag = 'internal scratch']
  %s0 = inlined_call_operand.hbm [shape: f32[2,3,16,16], index: 0, kind: input, shape index: {}]
  %s1 = inlined_call_operand.vmem [shape: f32[20,3], index: 1, kind: input, shape index: {}]
  %s2 = inlined_call_operand.vmem [shape: f32[20,1], index: 2, kind: input, shape index: {}]
  %s3 = inlined_call_operand.vmem [shape: f32[2,20,18,18], index: 3, kind: output, shape index: {}]
  %s4 = sld [smem:[#allocation0]]
  $region49: #{tpu_custom_call.1} parent=0
    _
  %s6 = ssub.s32 1, %s4
  %s7 = scalar_select 0, %s6, %s4
  $region1: #{tpu_custom_call.1} parent=0
    #allocation2 [shape = 'u8[49152]{0}', space=vmem, size = 0xc000, scoped, tag = 'input window, operand 0']
    #allocation3 [shape = 's32[2]{0}', space=sflag, size = 0x8, scoped, tag = 'scoped memory for tpu_custom_call.1']
    %8 = vsyncpa [#allocation3], 0
    %s9 = scalar_lea.sflag [#allocation3], 1
    %10 = vsyncpa %s9, 0
    loop: start=0, step=1, limit=4
    $region2: #{tpu_custom_call.1} parent=1 // loop_pre_header
      _
    $region3: #{tpu_custom_call.1} parent=1 // loop_header
      %s12 = sphi 0, %s16
      %p13 = scmp.ge.s32.totalorder %s12, 4
      %s22 = sphi 0, %s24
      %s25 = sphi 0, %s22
      %s26 = sphi 0, %s25
      %s42 = sphi 0, %s26
      %s46 = sphi 0, %s46
      %s48 = sphi 0, %s46
      %s49 = sphi 0, %s48
      %s63 = sphi 0, %s49
      %s67 = sphi 0, %s67
      %s69 = sphi 0, %s67
      %s70 = sphi 0, %s69
      %s84 = sphi 0, %s70
      %s90 = sphi 0, %s92
      %s93 = sphi 0, %s90
      %s94 = sphi 0, %s93
      %s110 = sphi 0, %s94
    $region4: #{tpu_custom_call.1} parent=1 // loop_header_branch
      %15 = sbr.rel (%p13) target = $region8
    $region5: #{tpu_custom_call.1} parent=1 // loop_body
      %s17 = ssub.s32 %s12, 1
      %s18 = ssub.s32 %s12, 2
      %s19 = sadd.s32 %s12, 1
      %s20 = ssub.s32 %s12, %s19
      %p21 = scmp.eq.s32.totalorder %s20, 0
      %s23 = sadd.s32 %s22, 1
      %s24 = scalar_select %p21, %s22, %s23
      %p27 = pneg %p21
      %p28 = scmp.eq.s32.totalorder %s12, 1
      %p29 = por %p27, %p28
      %p30 = scmp.ne.s32.totalorder %s22, %s25
      %p31 = scmp.eq.s32.totalorder %s12, 0
      %p32 = por %p30, %p31
      %p33 = scmp.ne.s32.totalorder %s22, %s25
      %p34 = scmp.eq.s32.totalorder %s17, 1
      %p35 = por %p33, %p34
      %p36 = scmp.ne.s32.totalorder %s25, %s26
      %p37 = scmp.eq.s32.totalorder %s17, 0
      %p38 = por %p36, %p37
      %p39 = scmp.ne.s32.totalorder %s25, %s26
      %p40 = scmp.eq.s32.totalorder %s18, 1
      %p41 = por %p39, %p40
      %p43 = scmp.ne.s32.totalorder %s26, %s42
      %p44 = scmp.eq.s32.totalorder %s18, 0
      %p45 = por %p43, %p44
      %s47 = sadd.s32 %s46, 1
      %p50 = scmp.eq.s32.totalorder %s12, 1
      %p51 = scmp.ne.s32.totalorder %s46, %s48
      %p52 = scmp.eq.s32.totalorder %s12, 0
      %p53 = por %p51, %p52
      %p54 = scmp.ne.s32.totalorder %s46, %s48
      %p55 = scmp.eq.s32.totalorder %s17, 1
      %p56 = por %p54, %p55
      %p57 = scmp.ne.s32.totalorder %s48, %s49
      %p58 = scmp.eq.s32.totalorder %s17, 0
      %p59 = por %p57, %p58
      %p60 = scmp.ne.s32.totalorder %s48, %s49
      %p61 = scmp.eq.s32.totalorder %s18, 1
      %p62 = por %p60, %p61
      %p64 = scmp.ne.s32.totalorder %s49, %s63
      %p65 = scmp.eq.s32.totalorder %s18, 0
      %p66 = por %p64, %p65
      %s68 = sadd.s32 %s67, 1
      %p71 = scmp.eq.s32.totalorder %s12, 1
      %p72 = scmp.ne.s32.totalorder %s67, %s69
      %p73 = scmp.eq.s32.totalorder %s12, 0
      %p74 = por %p72, %p73
      %p75 = scmp.ne.s32.totalorder %s67, %s69
      %p76 = scmp.eq.s32.totalorder %s17, 1
      %p77 = por %p75, %p76
      %p78 = scmp.ne.s32.totalorder %s69, %s70
      %p79 = scmp.eq.s32.totalorder %s17, 0
      %p80 = por %p78, %p79
      %p81 = scmp.ne.s32.totalorder %s69, %s70
      %p82 = scmp.eq.s32.totalorder %s18, 1
      %p83 = por %p81, %p82
      %p85 = scmp.ne.s32.totalorder %s70, %s84
      %p86 = scmp.eq.s32.totalorder %s18, 0
      %p87 = por %p85, %p86
      %s88 = ssub.s32 %s12, %s19
      %p89 = scmp.eq.s32.totalorder %s88, 0
      %s91 = sadd.s32 %s90, 1
      %s92 = scalar_select %p89, %s90, %s91
      %p95 = pneg %p89
      %p96 = scmp.eq.s32.totalorder %s12, 1
      %p97 = por %p95, %p96
      %p98 = scmp.ne.s32.totalorder %s90, %s93
      %p99 = scmp.eq.s32.totalorder %s12, 0
      %p100 = por %p98, %p99
      %p101 = scmp.ne.s32.totalorder %s90, %s93
      %p102 = scmp.eq.s32.totalorder %s17, 1
      %p103 = por %p101, %p102
      %p104 = scmp.ne.s32.totalorder %s93, %s94
      %p105 = scmp.eq.s32.totalorder %s17, 0
      %p106 = por %p104, %p105
      %p107 = scmp.ne.s32.totalorder %s93, %s94
      %p108 = scmp.eq.s32.totalorder %s18, 1
      %p109 = por %p107, %p108
      %p111 = scmp.ne.s32.totalorder %s94, %s110
      %p112 = scmp.eq.s32.totalorder %s18, 0
      %p113 = por %p111, %p112
      %p114 = scmp.le.s32.totalorder 1, %s12
      %p115 = scmp.lt.s32.totalorder %s12, 3
      %p116 = pnand %p114, %p115
      %p117 = pneg %p116
      // Predicated region
      $region9: #{tpu_custom_call.1} parent=5 // pred_check
        _
      $region10: #{tpu_custom_call.1} parent=5 // pred_check_branch
        %119 = sbr.rel (%p116) target = $region12
      $region11: #{tpu_custom_call.1} parent=5 // pred_region
        %s120 = ssub.s32 %s12, 1
        // Predicated region
        $region13: #{tpu_custom_call.1} parent=11 // pred_check
          %p121 = pneg %p59
        $region14: #{tpu_custom_call.1} parent=11 // pred_check_branch
          %123 = sbr.rel (%p121) target = $region16
        $region15: #{tpu_custom_call.1} parent=11 // pred_region
          _
        $region16: #{tpu_custom_call.1} parent=11 // pred_fallthru
          _
        // Predicated region
        $region17: #{tpu_custom_call.1} parent=11 // pred_check
          %p124 = pneg %p80
        $region18: #{tpu_custom_call.1} parent=11 // pred_check_branch
          %126 = sbr.rel (%p124) target = $region20
        $region19: #{tpu_custom_call.1} parent=11 // pred_region
          _
        $region20: #{tpu_custom_call.1} parent=11 // pred_fallthru
          _
      $region12: #{tpu_custom_call.1} parent=5 // pred_fallthru
        _
      %p127 = scmp.lt.s32.totalorder %s12, 2
      // Predicated region
      $region21: #{tpu_custom_call.1} parent=5 // pred_check
        %p128 = pneg %p127
      $region22: #{tpu_custom_call.1} parent=5 // pred_check_branch
        %130 = sbr.rel (%p128) target = $region24
      $region23: #{tpu_custom_call.1} parent=5 // pred_region
        // Predicated region
        $region25: #{tpu_custom_call.1} parent=23 // pred_check
          %p131 = pneg %p32
        $region26: #{tpu_custom_call.1} parent=23 // pred_check_branch
          %133 = sbr.rel (%p131) target = $region28
        $region27: #{tpu_custom_call.1} parent=23 // pred_region
          %s134 = sand.u32 %s22, 1
          %s135 = scalar_lea.sflag [#allocation3], %s134
          %s136 = sand.u32 %s22, 1
          %s137 = smul.addr %s136, 48
          %s138 = scalar_lea.vmem [#allocation2], %s137
          %140 = vsyncadd %s135, 0
          %s141 = smul.addr %s12, 6
          %s142 = smul.addr %s141, 8
          %s143 = scalar_lea.hbm %s0, %s142
          %s144 = sshll.u32 %s143, 4
          %s145 = int_to_ptr.hbm [resolvable:$true] %s144
          %s146 = sshll.u32 %s138, 4
          %s147 = int_to_ptr.vmem [resolvable:$true] %s146
          %152 = dma.hbm_to_vmem [thread:$0]  %s145, 768, %s147, %s135, 128, 128, 8
        $region28: #{tpu_custom_call.1} parent=23 // pred_fallthru
          _
      $region24: #{tpu_custom_call.1} parent=5 // pred_fallthru
        _
      %p153 = scmp.le.s32.totalorder 1, %s12
      %p154 = scmp.lt.s32.totalorder %s12, 3
      %p155 = pnand %p153, %p154
      %p156 = pneg %p155
      // Predicated region
      $region29: #{tpu_custom_call.1} parent=5 // pred_check
        _
      $region30: #{tpu_custom_call.1} parent=5 // pred_check_branch
        %158 = sbr.rel (%p155) target = $region32
      $region31: #{tpu_custom_call.1} parent=5 // pred_region
        %s159 = ssub.s32 %s12, 1
        %s160 = sand.u32 %s25, 1
        %s161 = scalar_lea.sflag [#allocation3], %s160
        %s162 = sand.u32 %s25, 1
        %s163 = smul.addr %s162, 48
        %s164 = scalar_lea.vmem [#allocation2], %s163
        // Predicated region
        $region33: #{tpu_custom_call.1} parent=31 // pred_check
          %p165 = pneg %p38
        $region34: #{tpu_custom_call.1} parent=31 // pred_check_branch
          %167 = sbr.rel (%p165) target = $region36
        $region35: #{tpu_custom_call.1} parent=31 // pred_region
          %169 = dma.done %s161, 768
        $region36: #{tpu_custom_call.1} parent=31 // pred_fallthru
          _
        %s170 = sand.u32 %s25, 1
        %s171 = scalar_lea.sflag [#allocation3], %s170
        %s172 = sand.u32 %s25, 1
        %s173 = smul.addr %s172, 48
        %s174 = scalar_lea.vmem [#allocation2], %s173
        %p175 = pneg %p38
        %p176 = pneg %p35
        %p177 = pneg %p59
        %p178 = pneg %p56
        %p179 = pneg %p80
        %p180 = pneg %p77
        %p181 = pneg %p106
        %p182 = pneg %p103
        %p183 = scmp.lt.s32.totalorder %s17, 1
        %s184 = scalar_select %p183, %s17, 1
        %s185 = smul.addr %s184, 60
        %s186 = smul.addr %s185, 8
        %s187 = scalar_lea.vmem %s3, %s186
        %p188 = scmp.lt.s32.totalorder %s17, 1
        %s189 = scalar_select %p188, %s17, 1
        %s190 = smul.addr %s189, 60
        %s191 = smul.addr %s190, 8
        %s192 = scalar_lea.vmem %s3, %s191
        %v193 = vld [vmem:[%s2] sm:$0xff]
        %v194 = vld [vmem:[%s2 + $0x8] sm:$0xff]
        %v195 = vld [vmem:[%s2 + $0x10] sm:$0xf]
        %v199 = vrot.slane %v193, 1
        %v200 = vrot.slane %v193, 2
        %v201 = vrot.slane %v193, 3
        %v202 = vrot.slane %v193, 4
        %v203 = vrot.slane %v193, 5
        %v204 = vrot.slane %v193, 6
        %v205 = vrot.slane %v193, 7
        %v206 = vrot.slane %v194, 1
        %v207 = vrot.slane %v194, 2
        %v208 = vrot.slane %v194, 3
        %v209 = vrot.slane %v194, 4
        %v210 = vrot.slane %v194, 5
        %v211 = vrot.slane %v194, 6
        %v212 = vrot.slane %v194, 7
        %v213 = vrot.slane %v195, 1
        %v214 = vrot.slane %v195, 2
        %v215 = vrot.slane %v195, 3
        %v233 = vtanh.pop %v193
        %v234 = vtanh.pop %v199
        %v235 = vtanh.pop %v200
        %v236 = vtanh.pop %v201
        %v237 = vtanh.pop %v202
        %v238 = vtanh.pop %v203
        %v239 = vtanh.pop %v204
        %v240 = vtanh.pop %v205
        %v241 = vtanh.pop %v194
        %v242 = vtanh.pop %v206
        %v243 = vtanh.pop %v207
        %v244 = vtanh.pop %v208
        %v245 = vtanh.pop %v209
        %v246 = vtanh.pop %v210
        %v247 = vtanh.pop %v211
        %v248 = vtanh.pop %v212
        %v249 = vtanh.pop %v195
        %v250 = vtanh.pop %v213
        %v251 = vtanh.pop %v214
        %v252 = vtanh.pop %v215
        %v273 = vperm.slane %v233, 0
        %v274 = vperm.slane %v234, 0
        %v275 = vperm.slane %v235, 0
        %v276 = vperm.slane %v236, 0
        %v277 = vperm.slane %v237, 0
        %v278 = vperm.slane %v238, 0
        %v279 = vperm.slane %v239, 0
        %v280 = vperm.slane %v240, 0
        %v281 = vperm.slane %v241, 0
        %v282 = vperm.slane %v242, 0
        %v283 = vperm.slane %v243, 0
        %v284 = vperm.slane %v244, 0
        %v285 = vperm.slane %v245, 0
        %v286 = vperm.slane %v246, 0
        %v287 = vperm.slane %v247, 0
        %v288 = vperm.slane %v248, 0
        %v289 = vperm.slane %v249, 0
        %v290 = vperm.slane %v250, 0
        %v291 = vperm.slane %v251, 0
        %v292 = vperm.slane %v252, 0
        %293 = vset.pattern.permute.xlu0 0
        %294 = vperm.xlu0 %293, %v273
        %v295 = vpop.permute.xlu0 %294
        %297 = vset.pattern.permute.xlu0 0
        %298 = vperm.xlu0 %297, %v274
        %v299 = vpop.permute.xlu0 %298
        %301 = vset.pattern.permute.xlu0 0
        %302 = vperm.xlu0 %301, %v275
        %v303 = vpop.permute.xlu0 %302
        %305 = vset.pattern.permute.xlu0 0
        %306 = vperm.xlu0 %305, %v276
        %v307 = vpop.permute.xlu0 %306
        %309 = vset.pattern.permute.xlu0 0
        %310 = vperm.xlu0 %309, %v277
        %v311 = vpop.permute.xlu0 %310
        %313 = vset.pattern.permute.xlu0 0
        %314 = vperm.xlu0 %313, %v278
        %v315 = vpop.permute.xlu0 %314
        %317 = vset.pattern.permute.xlu0 0
        %318 = vperm.xlu0 %317, %v279
        %v319 = vpop.permute.xlu0 %318
        %321 = vset.pattern.permute.xlu0 0
        %322 = vperm.xlu0 %321, %v280
        %v323 = vpop.permute.xlu0 %322
        %325 = vset.pattern.permute.xlu0 0
        %326 = vperm.xlu0 %325, %v281
        %v327 = vpop.permute.xlu0 %326
        %329 = vset.pattern.permute.xlu0 0
        %330 = vperm.xlu0 %329, %v282
        %v331 = vpop.permute.xlu0 %330
        %333 = vset.pattern.permute.xlu0 0
        %334 = vperm.xlu0 %333, %v283
        %v335 = vpop.permute.xlu0 %334
        %337 = vset.pattern.permute.xlu0 0
        %338 = vperm.xlu0 %337, %v284
        %v339 = vpop.permute.xlu0 %338
        %341 = vset.pattern.permute.xlu0 0
        %342 = vperm.xlu0 %341, %v285
        %v343 = vpop.permute.xlu0 %342
        %345 = vset.pattern.permute.xlu0 0
        %346 = vperm.xlu0 %345, %v286
        %v347 = vpop.permute.xlu0 %346
        %349 = vset.pattern.permute.xlu0 0
        %350 = vperm.xlu0 %349, %v287
        %v351 = vpop.permute.xlu0 %350
        %353 = vset.pattern.permute.xlu0 0
        %354 = vperm.xlu0 %353, %v288
        %v355 = vpop.permute.xlu0 %354
        %357 = vset.pattern.permute.xlu0 0
        %358 = vperm.xlu0 %357, %v289
        %v359 = vpop.permute.xlu0 %358
        %361 = vset.pattern.permute.xlu0 0
        %362 = vperm.xlu0 %361, %v290
        %v363 = vpop.permute.xlu0 %362
        %365 = vset.pattern.permute.xlu0 0
        %366 = vperm.xlu0 %365, %v291
        %v367 = vpop.permute.xlu0 %366
        %369 = vset.pattern.permute.xlu0 0
        %370 = vperm.xlu0 %369, %v292
        %v371 = vpop.permute.xlu0 %370
        %vm373 = vcmask 146432
        %374 = vst.msk [vmem:[%s192] sm:$0xff] %vm373, %v295
        %375 = vst.msk [vmem:[%s192 + $0x8] sm:$0xff] %vm373, %v295
        %vm376 = vcmask 140288
        %377 = vst.msk [vmem:[%s192 + $0x10] sm:$0x3] %vm376, %v295
        %378 = vst.msk [vmem:[%s192 + $0x18] sm:$0xff] %vm373, %v299
        %379 = vst.msk [vmem:[%s192 + $0x20] sm:$0xff] %vm373, %v299
        %380 = vst.msk [vmem:[%s192 + $0x28] sm:$0x3] %vm376, %v299
        %381 = vst.msk [vmem:[%s192 + $0x30] sm:$0xff] %vm373, %v303
        %382 = vst.msk [vmem:[%s192 + $0x38] sm:$0xff] %vm373, %v303
        %383 = vst.msk [vmem:[%s192 + $0x40] sm:$0x3] %vm376, %v303
        %384 = vst.msk [vmem:[%s192 + $0x48] sm:$0xff] %vm373, %v307
        %385 = vst.msk [vmem:[%s192 + $0x50] sm:$0xff] %vm373, %v307
        %386 = vst.msk [vmem:[%s192 + $0x58] sm:$0x3] %vm376, %v307
        %387 = vst.msk [vmem:[%s192 + $0x60] sm:$0xff] %vm373, %v311
        %388 = vst.msk [vmem:[%s192 + $0x68] sm:$0xff] %vm373, %v311
        %389 = vst.msk [vmem:[%s192 + $0x70] sm:$0x3] %vm376, %v311
        %390 = vst.msk [vmem:[%s192 + $0x78] sm:$0xff] %vm373, %v315
        %391 = vst.msk [vmem:[%s192 + $0x80] sm:$0xff] %vm373, %v315
        %392 = vst.msk [vmem:[%s192 + $0x88] sm:$0x3] %vm376, %v315
        %393 = vst.msk [vmem:[%s192 + $0x90] sm:$0xff] %vm373, %v319
        %394 = vst.msk [vmem:[%s192 + $0x98] sm:$0xff] %vm373, %v319
        %395 = vst.msk [vmem:[%s192 + $0xa0] sm:$0x3] %vm376, %v319
        %396 = vst.msk [vmem:[%s192 + $0xa8] sm:$0xff] %vm373, %v323
        %397 = vst.msk [vmem:[%s192 + $0xb0] sm:$0xff] %vm373, %v323
        %398 = vst.msk [vmem:[%s192 + $0xb8] sm:$0x3] %vm376, %v323
        %399 = vst.msk [vmem:[%s192 + $0xc0] sm:$0xff] %vm373, %v327
        %400 = vst.msk [vmem:[%s192 + $0xc8] sm:$0xff] %vm373, %v327
        %401 = vst.msk [vmem:[%s192 + $0xd0] sm:$0x3] %vm376, %v327
        %402 = vst.msk [vmem:[%s192 + $0xd8] sm:$0xff] %vm373, %v331
        %403 = vst.msk [vmem:[%s192 + $0xe0] sm:$0xff] %vm373, %v331
        %404 = vst.msk [vmem:[%s192 + $0xe8] sm:$0x3] %vm376, %v331
        %405 = vst.msk [vmem:[%s192 + $0xf0] sm:$0xff] %vm373, %v335
        %406 = vst.msk [vmem:[%s192 + $0xf8] sm:$0xff] %vm373, %v335
        %407 = vst.msk [vmem:[%s192 + $0x100] sm:$0x3] %vm376, %v335
        %408 = vst.msk [vmem:[%s192 + $0x108] sm:$0xff] %vm373, %v339
        %409 = vst.msk [vmem:[%s192 + $0x110] sm:$0xff] %vm373, %v339
        %410 = vst.msk [vmem:[%s192 + $0x118] sm:$0x3] %vm376, %v339
        %411 = vst.msk [vmem:[%s192 + $0x120] sm:$0xff] %vm373, %v343
        %412 = vst.msk [vmem:[%s192 + $0x128] sm:$0xff] %vm373, %v343
        %413 = vst.msk [vmem:[%s192 + $0x130] sm:$0x3] %vm376, %v343
        %414 = vst.msk [vmem:[%s192 + $0x138] sm:$0xff] %vm373, %v347
        %415 = vst.msk [vmem:[%s192 + $0x140] sm:$0xff] %vm373, %v347
        %416 = vst.msk [vmem:[%s192 + $0x148] sm:$0x3] %vm376, %v347
        %417 = vst.msk [vmem:[%s192 + $0x150] sm:$0xff] %vm373, %v351
        %418 = vst.msk [vmem:[%s192 + $0x158] sm:$0xff] %vm373, %v351
        %419 = vst.msk [vmem:[%s192 + $0x160] sm:$0x3] %vm376, %v351
        %420 = vst.msk [vmem:[%s192 + $0x168] sm:$0xff] %vm373, %v355
        %421 = vst.msk [vmem:[%s192 + $0x170] sm:$0xff] %vm373, %v355
        %422 = vst.msk [vmem:[%s192 + $0x178] sm:$0x3] %vm376, %v355
        %423 = vst.msk [vmem:[%s192 + $0x180] sm:$0xff] %vm373, %v359
        %424 = vst.msk [vmem:[%s192 + $0x188] sm:$0xff] %vm373, %v359
        %425 = vst.msk [vmem:[%s192 + $0x190] sm:$0x3] %vm376, %v359
        %426 = vst.msk [vmem:[%s192 + $0x198] sm:$0xff] %vm373, %v363
        %427 = vst.msk [vmem:[%s192 + $0x1a0] sm:$0xff] %vm373, %v363
        %428 = vst.msk [vmem:[%s192 + $0x1a8] sm:$0x3] %vm376, %v363
        %429 = vst.msk [vmem:[%s192 + $0x1b0] sm:$0xff] %vm373, %v367
        %430 = vst.msk [vmem:[%s192 + $0x1b8] sm:$0xff] %vm373, %v367
        %431 = vst.msk [vmem:[%s192 + $0x1c0] sm:$0x3] %vm376, %v367
        %432 = vst.msk [vmem:[%s192 + $0x1c8] sm:$0xff] %vm373, %v371
        %433 = vst.msk [vmem:[%s192 + $0x1d0] sm:$0xff] %vm373, %v371
        %434 = vst.msk [vmem:[%s192 + $0x1d8] sm:$0x3] %vm376, %v371
        %v435 = vld [vmem:[%s164] sm:$0xff]
        %v436 = vld [vmem:[%s164 + $0x8] sm:$0xff]
        %v437 = vld [vmem:[%s164 + $0x10] sm:$0xff]
        %v438 = vld [vmem:[%s164 + $0x18] sm:$0xff]
        %v439 = vld [vmem:[%s164 + $0x20] sm:$0xff]
        %v440 = vld [vmem:[%s164 + $0x28] sm:$0xff]
        %v441 = vld [vmem:[%s1] sm:$0xff]
        %v442 = vld [vmem:[%s1 + $0x8] sm:$0xff]
        %v443 = vld [vmem:[%s1 + $0x10] sm:$0xf]
        %v444 = vperm.slane %v193, 0
        %v445 = vperm.slane %v199, 0
        %v446 = vperm.slane %v200, 0
        %v447 = vperm.slane %v201, 0
        %v448 = vperm.slane %v202, 0
        %v449 = vperm.slane %v203, 0
        %v450 = vperm.slane %v204, 0
        %v451 = vperm.slane %v205, 0
        %v452 = vperm.slane %v194, 0
        %v453 = vperm.slane %v206, 0
        %v454 = vperm.slane %v207, 0
        %v455 = vperm.slane %v208, 0
        %v456 = vperm.slane %v209, 0
        %v457 = vperm.slane %v210, 0
        %v458 = vperm.slane %v211, 0
        %v459 = vperm.slane %v212, 0
        %v460 = vperm.slane %v195, 0
        %v461 = vperm.slane %v213, 0
        %v462 = vperm.slane %v214, 0
        %v463 = vperm.slane %v215, 0
        %464 = vset.pattern.permute.xlu0 0
        %465 = vperm.xlu0 %464, %v444
        %v466 = vpop.permute.xlu0 %465
        %468 = vset.pattern.permute.xlu0 0
        %469 = vperm.xlu0 %468, %v445
        %v470 = vpop.permute.xlu0 %469
        %472 = vset.pattern.permute.xlu0 0
        %473 = vperm.xlu0 %472, %v446
        %v474 = vpop.permute.xlu0 %473
        %476 = vset.pattern.permute.xlu0 0
        %477 = vperm.xlu0 %476, %v447
        %v478 = vpop.permute.xlu0 %477
        %480 = vset.pattern.permute.xlu0 0
        %481 = vperm.xlu0 %480, %v448
        %v482 = vpop.permute.xlu0 %481
        %484 = vset.pattern.permute.xlu0 0
        %485 = vperm.xlu0 %484, %v449
        %v486 = vpop.permute.xlu0 %485
        %488 = vset.pattern.permute.xlu0 0
        %489 = vperm.xlu0 %488, %v450
        %v490 = vpop.permute.xlu0 %489
        %492 = vset.pattern.permute.xlu0 0
        %493 = vperm.xlu0 %492, %v451
        %v494 = vpop.permute.xlu0 %493
        %496 = vset.pattern.permute.xlu0 0
        %497 = vperm.xlu0 %496, %v452
        %v498 = vpop.permute.xlu0 %497
        %500 = vset.pattern.permute.xlu0 0
        %501 = vperm.xlu0 %500, %v453
        %v502 = vpop.permute.xlu0 %501
        %504 = vset.pattern.permute.xlu0 0
        %505 = vperm.xlu0 %504, %v454
        %v506 = vpop.permute.xlu0 %505
        %508 = vset.pattern.permute.xlu0 0
        %509 = vperm.xlu0 %508, %v455
        %v510 = vpop.permute.xlu0 %509
        %512 = vset.pattern.permute.xlu0 0
        %513 = vperm.xlu0 %512, %v456
        %v514 = vpop.permute.xlu0 %513
        %516 = vset.pattern.permute.xlu0 0
        %517 = vperm.xlu0 %516, %v457
        %v518 = vpop.permute.xlu0 %517
        %520 = vset.pattern.permute.xlu0 0
        %521 = vperm.xlu0 %520, %v458
        %v522 = vpop.permute.xlu0 %521
        %524 = vset.pattern.permute.xlu0 0
        %525 = vperm.xlu0 %524, %v459
        %v526 = vpop.permute.xlu0 %525
        %528 = vset.pattern.permute.xlu0 0
        %529 = vperm.xlu0 %528, %v460
        %v530 = vpop.permute.xlu0 %529
        %532 = vset.pattern.permute.xlu0 0
        %533 = vperm.xlu0 %532, %v461
        %v534 = vpop.permute.xlu0 %533
        %536 = vset.pattern.permute.xlu0 0
        %537 = vperm.xlu0 %536, %v462
        %v538 = vpop.permute.xlu0 %537
        %540 = vset.pattern.permute.xlu0 0
        %541 = vperm.xlu0 %540, %v463
        %v542 = vpop.permute.xlu0 %541
        %v547 = vrot.slane %v441, 1
        %v548 = vrot.slane %v441, 2
        %v549 = vrot.slane %v441, 3
        %v550 = vrot.slane %v441, 4
        %v551 = vrot.slane %v441, 5
        %v552 = vrot.slane %v441, 6
        %v553 = vrot.slane %v441, 7
        %v554 = vrot.slane %v442, 1
        %v555 = vrot.slane %v442, 2
        %v556 = vrot.slane %v442, 3
        %v557 = vrot.slane %v442, 4
        %v558 = vrot.slane %v442, 5
        %v559 = vrot.slane %v442, 6
        %v560 = vrot.slane %v442, 7
        %v561 = vrot.slane %v443, 1
        %v562 = vrot.slane %v443, 2
        %v563 = vrot.slane %v443, 3
        %v564 = vperm.slane %v441, 0
        %v565 = vperm.slane %v547, 0
        %v566 = vperm.slane %v548, 0
        %v567 = vperm.slane %v549, 0
        %v568 = vperm.slane %v550, 0
        %v569 = vperm.slane %v551, 0
        %v570 = vperm.slane %v552, 0
        %v571 = vperm.slane %v553, 0
        %v572 = vperm.slane %v442, 0
        %v573 = vperm.slane %v554, 0
        %v574 = vperm.slane %v555, 0
        %v575 = vperm.slane %v556, 0
        %v576 = vperm.slane %v557, 0
        %v577 = vperm.slane %v558, 0
        %v578 = vperm.slane %v559, 0
        %v579 = vperm.slane %v560, 0
        %v580 = vperm.slane %v443, 0
        %v581 = vperm.slane %v561, 0
        %v582 = vperm.slane %v562, 0
        %v583 = vperm.slane %v563, 0
        %584 = vset.pattern.permute.xlu0 0
        %585 = vperm.xlu0 %584, %v564
        %v586 = vpop.permute.xlu0 %585
        %588 = vset.pattern.permute.xlu0 0
        %589 = vperm.xlu0 %588, %v565
        %v590 = vpop.permute.xlu0 %589
        %592 = vset.pattern.permute.xlu0 0
        %593 = vperm.xlu0 %592, %v566
        %v594 = vpop.permute.xlu0 %593
        %596 = vset.pattern.permute.xlu0 0
        %597 = vperm.xlu0 %596, %v567
        %v598 = vpop.permute.xlu0 %597
        %600 = vset.pattern.permute.xlu0 0
        %601 = vperm.xlu0 %600, %v568
        %v602 = vpop.permute.xlu0 %601
        %604 = vset.pattern.permute.xlu0 0
        %605 = vperm.xlu0 %604, %v569
        %v606 = vpop.permute.xlu0 %605
        %608 = vset.pattern.permute.xlu0 0
        %609 = vperm.xlu0 %608, %v570
        %v610 = vpop.permute.xlu0 %609
        %612 = vset.pattern.permute.xlu0 0
        %613 = vperm.xlu0 %612, %v571
        %v614 = vpop.permute.xlu0 %613
        %616 = vset.pattern.permute.xlu0 0
        %617 = vperm.xlu0 %616, %v572
        %v618 = vpop.permute.xlu0 %617
        %620 = vset.pattern.permute.xlu0 0
        %621 = vperm.xlu0 %620, %v573
        %v622 = vpop.permute.xlu0 %621
        %624 = vset.pattern.permute.xlu0 0
        %625 = vperm.xlu0 %624, %v574
        %v626 = vpop.permute.xlu0 %625
        %628 = vset.pattern.permute.xlu0 0
        %629 = vperm.xlu0 %628, %v575
        %v630 = vpop.permute.xlu0 %629
        %632 = vset.pattern.permute.xlu0 0
        %633 = vperm.xlu0 %632, %v576
        %v634 = vpop.permute.xlu0 %633
        %636 = vset.pattern.permute.xlu0 0
        %637 = vperm.xlu0 %636, %v577
        %v638 = vpop.permute.xlu0 %637
        %640 = vset.pattern.permute.xlu0 0
        %641 = vperm.xlu0 %640, %v578
        %v642 = vpop.permute.xlu0 %641
        %644 = vset.pattern.permute.xlu0 0
        %645 = vperm.xlu0 %644, %v579
        %v646 = vpop.permute.xlu0 %645
        %648 = vset.pattern.permute.xlu0 0
        %649 = vperm.xlu0 %648, %v580
        %v650 = vpop.permute.xlu0 %649
        %652 = vset.pattern.permute.xlu0 0
        %653 = vperm.xlu0 %652, %v581
        %v654 = vpop.permute.xlu0 %653
        %656 = vset.pattern.permute.xlu0 0
        %657 = vperm.xlu0 %656, %v582
        %v658 = vpop.permute.xlu0 %657
        %660 = vset.pattern.permute.xlu0 0
        %661 = vperm.xlu0 %660, %v583
        %v662 = vpop.permute.xlu0 %661
        %v664 = vmul.f32 %v586, %v435
        %v665 = vmul.f32 %v586, %v436
        %v666 = vmul.f32 %v590, %v435
        %v667 = vmul.f32 %v590, %v436
        %v668 = vmul.f32 %v594, %v435
        %v669 = vmul.f32 %v594, %v436
        %v670 = vmul.f32 %v598, %v435
        %v671 = vmul.f32 %v598, %v436
        %v672 = vmul.f32 %v602, %v435
        %v673 = vmul.f32 %v602, %v436
        %v674 = vmul.f32 %v606, %v435
        %v675 = vmul.f32 %v606, %v436
        %v676 = vmul.f32 %v610, %v435
        %v677 = vmul.f32 %v610, %v436
        %v678 = vmul.f32 %v614, %v435
        %v679 = vmul.f32 %v614, %v436
        %v680 = vmul.f32 %v618, %v435
        %v681 = vmul.f32 %v618, %v436
        %v682 = vmul.f32 %v622, %v435
        %v683 = vmul.f32 %v622, %v436
        %v684 = vmul.f32 %v626, %v435
        %v685 = vmul.f32 %v626, %v436
        %v686 = vmul.f32 %v630, %v435
        %v687 = vmul.f32 %v630, %v436
        %v688 = vmul.f32 %v634, %v435
        %v689 = vmul.f32 %v634, %v436
        %v690 = vmul.f32 %v638, %v435
        %v691 = vmul.f32 %v638, %v436
        %v692 = vmul.f32 %v642, %v435
        %v693 = vmul.f32 %v642, %v436
        %v694 = vmul.f32 %v646, %v435
        %v695 = vmul.f32 %v646, %v436
        %v696 = vmul.f32 %v650, %v435
        %v697 = vmul.f32 %v650, %v436
        %v698 = vmul.f32 %v654, %v435
        %v699 = vmul.f32 %v654, %v436
        %v700 = vmul.f32 %v658, %v435
        %v701 = vmul.f32 %v658, %v436
        %v702 = vmul.f32 %v662, %v435
        %v703 = vmul.f32 %v662, %v436
        %v704 = vadd.f32 %v466, %v664
        %v705 = vadd.f32 %v466, %v665
        %v706 = vadd.f32 %v470, %v666
        %v707 = vadd.f32 %v470, %v667
        %v708 = vadd.f32 %v474, %v668
        %v709 = vadd.f32 %v474, %v669
        %v710 = vadd.f32 %v478, %v670
        %v711 = vadd.f32 %v478, %v671
        %v712 = vadd.f32 %v482, %v672
        %v713 = vadd.f32 %v482, %v673
        %v714 = vadd.f32 %v486, %v674
        %v715 = vadd.f32 %v486, %v675
        %v716 = vadd.f32 %v490, %v676
        %v717 = vadd.f32 %v490, %v677
        %v718 = vadd.f32 %v494, %v678
        %v719 = vadd.f32 %v494, %v679
        %v720 = vadd.f32 %v498, %v680
        %v721 = vadd.f32 %v498, %v681
        %v722 = vadd.f32 %v502, %v682
        %v723 = vadd.f32 %v502, %v683
        %v724 = vadd.f32 %v506, %v684
        %v725 = vadd.f32 %v506, %v685
        %v726 = vadd.f32 %v510, %v686
        %v727 = vadd.f32 %v510, %v687
        %v728 = vadd.f32 %v514, %v688
        %v729 = vadd.f32 %v514, %v689
        %v730 = vadd.f32 %v518, %v690
        %v731 = vadd.f32 %v518, %v691
        %v732 = vadd.f32 %v522, %v692
        %v733 = vadd.f32 %v522, %v693
        %v734 = vadd.f32 %v526, %v694
        %v735 = vadd.f32 %v526, %v695
        %v736 = vadd.f32 %v530, %v696
        %v737 = vadd.f32 %v530, %v697
        %v738 = vadd.f32 %v534, %v698
        %v739 = vadd.f32 %v534, %v699
        %v740 = vadd.f32 %v538, %v700
        %v741 = vadd.f32 %v538, %v701
        %v742 = vadd.f32 %v542, %v702
        %v743 = vadd.f32 %v542, %v703
        %744 = vset.pattern.permute.xlu0 1
        %745 = vperm.xlu0 %744, %v564
        %v746 = vpop.permute.xlu0 %745
        %748 = vset.pattern.permute.xlu0 1
        %749 = vperm.xlu0 %748, %v565
        %v750 = vpop.permute.xlu0 %749
        %752 = vset.pattern.permute.xlu0 1
        %753 = vperm.xlu0 %752, %v566
        %v754 = vpop.permute.xlu0 %753
        %756 = vset.pattern.permute.xlu0 1
        %757 = vperm.xlu0 %756, %v567
        %v758 = vpop.permute.xlu0 %757
        %760 = vset.pattern.permute.xlu0 1
        %761 = vperm.xlu0 %760, %v568
        %v762 = vpop.permute.xlu0 %761
        %764 = vset.pattern.permute.xlu0 1
        %765 = vperm.xlu0 %764, %v569
        %v766 = vpop.permute.xlu0 %765
        %768 = vset.pattern.permute.xlu0 1
        %769 = vperm.xlu0 %768, %v570
        %v770 = vpop.permute.xlu0 %769
        %772 = vset.pattern.permute.xlu0 1
        %773 = vperm.xlu0 %772, %v571
        %v774 = vpop.permute.xlu0 %773
        %776 = vset.pattern.permute.xlu0 1
        %777 = vperm.xlu0 %776, %v572
        %v778 = vpop.permute.xlu0 %777
        %780 = vset.pattern.permute.xlu0 1
        %781 = vperm.xlu0 %780, %v573
        %v782 = vpop.permute.xlu0 %781
        %784 = vset.pattern.permute.xlu0 1
        %785 = vperm.xlu0 %784, %v574
        %v786 = vpop.permute.xlu0 %785
        %788 = vset.pattern.permute.xlu0 1
        %789 = vperm.xlu0 %788, %v575
        %v790 = vpop.permute.xlu0 %789
        %792 = vset.pattern.permute.xlu0 1
        %793 = vperm.xlu0 %792, %v576
        %v794 = vpop.permute.xlu0 %793
        %796 = vset.pattern.permute.xlu0 1
        %797 = vperm.xlu0 %796, %v577
        %v798 = vpop.permute.xlu0 %797
        %800 = vset.pattern.permute.xlu0 1
        %801 = vperm.xlu0 %800, %v578
        %v802 = vpop.permute.xlu0 %801
        %804 = vset.pattern.permute.xlu0 1
        %805 = vperm.xlu0 %804, %v579
        %v806 = vpop.permute.xlu0 %805
        %808 = vset.pattern.permute.xlu0 1
        %809 = vperm.xlu0 %808, %v580
        %v810 = vpop.permute.xlu0 %809
        %812 = vset.pattern.permute.xlu0 1
        %813 = vperm.xlu0 %812, %v581
        %v814 = vpop.permute.xlu0 %813
        %816 = vset.pattern.permute.xlu0 1
        %817 = vperm.xlu0 %816, %v582
        %v818 = vpop.permute.xlu0 %817
        %820 = vset.pattern.permute.xlu0 1
        %821 = vperm.xlu0 %820, %v583
        %v822 = vpop.permute.xlu0 %821
        %v824 = vmul.f32 %v746, %v437
        %v825 = vmul.f32 %v746, %v438
        %v826 = vmul.f32 %v750, %v437
        %v827 = vmul.f32 %v750, %v438
        %v828 = vmul.f32 %v754, %v437
        %v829 = vmul.f32 %v754, %v438
        %v830 = vmul.f32 %v758, %v437
        %v831 = vmul.f32 %v758, %v438
        %v832 = vmul.f32 %v762, %v437
        %v833 = vmul.f32 %v762, %v438
        %v834 = vmul.f32 %v766, %v437
        %v835 = vmul.f32 %v766, %v438
        %v836 = vmul.f32 %v770, %v437
        %v837 = vmul.f32 %v770, %v438
        %v838 = vmul.f32 %v774, %v437
        %v839 = vmul.f32 %v774, %v438
        %v840 = vmul.f32 %v778, %v437
        %v841 = vmul.f32 %v778, %v438
        %v842 = vmul.f32 %v782, %v437
        %v843 = vmul.f32 %v782, %v438
        %v844 = vmul.f32 %v786, %v437
        %v845 = vmul.f32 %v786, %v438
        %v846 = vmul.f32 %v790, %v437
        %v847 = vmul.f32 %v790, %v438
        %v848 = vmul.f32 %v794, %v437
        %v849 = vmul.f32 %v794, %v438
        %v850 = vmul.f32 %v798, %v437
        %v851 = vmul.f32 %v798, %v438
        %v852 = vmul.f32 %v802, %v437
        %v853 = vmul.f32 %v802, %v438
        %v854 = vmul.f32 %v806, %v437
        %v855 = vmul.f32 %v806, %v438
        %v856 = vmul.f32 %v810, %v437
        %v857 = vmul.f32 %v810, %v438
        %v858 = vmul.f32 %v814, %v437
        %v859 = vmul.f32 %v814, %v438
        %v860 = vmul.f32 %v818, %v437
        %v861 = vmul.f32 %v818, %v438
        %v862 = vmul.f32 %v822, %v437
        %v863 = vmul.f32 %v822, %v438
        %v864 = vadd.f32 %v704, %v824
        %v865 = vadd.f32 %v705, %v825
        %v866 = vadd.f32 %v706, %v826
        %v867 = vadd.f32 %v707, %v827
        %v868 = vadd.f32 %v708, %v828
        %v869 = vadd.f32 %v709, %v829
        %v870 = vadd.f32 %v710, %v830
        %v871 = vadd.f32 %v711, %v831
        %v872 = vadd.f32 %v712, %v832
        %v873 = vadd.f32 %v713, %v833
        %v874 = vadd.f32 %v714, %v834
        %v875 = vadd.f32 %v715, %v835
        %v876 = vadd.f32 %v716, %v836
        %v877 = vadd.f32 %v717, %v837
        %v878 = vadd.f32 %v718, %v838
        %v879 = vadd.f32 %v719, %v839
        %v880 = vadd.f32 %v720, %v840
        %v881 = vadd.f32 %v721, %v841
        %v882 = vadd.f32 %v722, %v842
        %v883 = vadd.f32 %v723, %v843
        %v884 = vadd.f32 %v724, %v844
        %v885 = vadd.f32 %v725, %v845
        %v886 = vadd.f32 %v726, %v846
        %v887 = vadd.f32 %v727, %v847
        %v888 = vadd.f32 %v728, %v848
        %v889 = vadd.f32 %v729, %v849
        %v890 = vadd.f32 %v730, %v850
        %v891 = vadd.f32 %v731, %v851
        %v892 = vadd.f32 %v732, %v852
        %v893 = vadd.f32 %v733, %v853
        %v894 = vadd.f32 %v734, %v854
        %v895 = vadd.f32 %v735, %v855
        %v896 = vadd.f32 %v736, %v856
        %v897 = vadd.f32 %v737, %v857
        %v898 = vadd.f32 %v738, %v858
        %v899 = vadd.f32 %v739, %v859
        %v900 = vadd.f32 %v740, %v860
        %v901 = vadd.f32 %v741, %v861
        %v902 = vadd.f32 %v742, %v862
        %v903 = vadd.f32 %v743, %v863
        %904 = vset.pattern.permute.xlu0 2
        %905 = vperm.xlu0 %904, %v564
        %v906 = vpop.permute.xlu0 %905
        %908 = vset.pattern.permute.xlu0 2
        %909 = vperm.xlu0 %908, %v565
        %v910 = vpop.permute.xlu0 %909
        %912 = vset.pattern.permute.xlu0 2
        %913 = vperm.xlu0 %912, %v566
        %v914 = vpop.permute.xlu0 %913
        %916 = vset.pattern.permute.xlu0 2
        %917 = vperm.xlu0 %916, %v567
        %v918 = vpop.permute.xlu0 %917
        %920 = vset.pattern.permute.xlu0 2
        %921 = vperm.xlu0 %920, %v568
        %v922 = vpop.permute.xlu0 %921
        %924 = vset.pattern.permute.xlu0 2
        %925 = vperm.xlu0 %924, %v569
        %v926 = vpop.permute.xlu0 %925
        %928 = vset.pattern.permute.xlu0 2
        %929 = vperm.xlu0 %928, %v570
        %v930 = vpop.permute.xlu0 %929
        %932 = vset.pattern.permute.xlu0 2
        %933 = vperm.xlu0 %932, %v571
        %v934 = vpop.permute.xlu0 %933
        %936 = vset.pattern.permute.xlu0 2
        %937 = vperm.xlu0 %936, %v572
        %v938 = vpop.permute.xlu0 %937
        %940 = vset.pattern.permute.xlu0 2
        %941 = vperm.xlu0 %940, %v573
        %v942 = vpop.permute.xlu0 %941
        %944 = vset.pattern.permute.xlu0 2
        %945 = vperm.xlu0 %944, %v574
        %v946 = vpop.permute.xlu0 %945
        %948 = vset.pattern.permute.xlu0 2
        %949 = vperm.xlu0 %948, %v575
        %v950 = vpop.permute.xlu0 %949
        %952 = vset.pattern.permute.xlu0 2
        %953 = vperm.xlu0 %952, %v576
        %v954 = vpop.permute.xlu0 %953
        %956 = vset.pattern.permute.xlu0 2
        %957 = vperm.xlu0 %956, %v577
        %v958 = vpop.permute.xlu0 %957
        %960 = vset.pattern.permute.xlu0 2
        %961 = vperm.xlu0 %960, %v578
        %v962 = vpop.permute.xlu0 %961
        %964 = vset.pattern.permute.xlu0 2
        %965 = vperm.xlu0 %964, %v579
        %v966 = vpop.permute.xlu0 %965
        %968 = vset.pattern.permute.xlu0 2
        %969 = vperm.xlu0 %968, %v580
        %v970 = vpop.permute.xlu0 %969
        %972 = vset.pattern.permute.xlu0 2
        %973 = vperm.xlu0 %972, %v581
        %v974 = vpop.permute.xlu0 %973
        %976 = vset.pattern.permute.xlu0 2
        %977 = vperm.xlu0 %976, %v582
        %v978 = vpop.permute.xlu0 %977
        %980 = vset.pattern.permute.xlu0 2
        %981 = vperm.xlu0 %980, %v583
        %v982 = vpop.permute.xlu0 %981
        %v984 = vmul.f32 %v906, %v439
        %v985 = vmul.f32 %v906, %v440
        %v986 = vmul.f32 %v910, %v439
        %v987 = vmul.f32 %v910, %v440
        %v988 = vmul.f32 %v914, %v439
        %v989 = vmul.f32 %v914, %v440
        %v990 = vmul.f32 %v918, %v439
        %v991 = vmul.f32 %v918, %v440
        %v992 = vmul.f32 %v922, %v439
        %v993 = vmul.f32 %v922, %v440
        %v994 = vmul.f32 %v926, %v439
        %v995 = vmul.f32 %v926, %v440
        %v996 = vmul.f32 %v930, %v439
        %v997 = vmul.f32 %v930, %v440
        %v998 = vmul.f32 %v934, %v439
        %v999 = vmul.f32 %v934, %v440
        %v1000 = vmul.f32 %v938, %v439
        %v1001 = vmul.f32 %v938, %v440
        %v1002 = vmul.f32 %v942, %v439
        %v1003 = vmul.f32 %v942, %v440
        %v1004 = vmul.f32 %v946, %v439
        %v1005 = vmul.f32 %v946, %v440
        %v1006 = vmul.f32 %v950, %v439
        %v1007 = vmul.f32 %v950, %v440
        %v1008 = vmul.f32 %v954, %v439
        %v1009 = vmul.f32 %v954, %v440
        %v1010 = vmul.f32 %v958, %v439
        %v1011 = vmul.f32 %v958, %v440
        %v1012 = vmul.f32 %v962, %v439
        %v1013 = vmul.f32 %v962, %v440
        %v1014 = vmul.f32 %v966, %v439
        %v1015 = vmul.f32 %v966, %v440
        %v1016 = vmul.f32 %v970, %v439
        %v1017 = vmul.f32 %v970, %v440
        %v1018 = vmul.f32 %v974, %v439
        %v1019 = vmul.f32 %v974, %v440
        %v1020 = vmul.f32 %v978, %v439
        %v1021 = vmul.f32 %v978, %v440
        %v1022 = vmul.f32 %v982, %v439
        %v1023 = vmul.f32 %v982, %v440
        %v1024 = vadd.f32 %v864, %v984
        %v1025 = vadd.f32 %v865, %v985
        %v1026 = vadd.f32 %v866, %v986
        %v1027 = vadd.f32 %v867, %v987
        %v1028 = vadd.f32 %v868, %v988
        %v1029 = vadd.f32 %v869, %v989
        %v1030 = vadd.f32 %v870, %v990
        %v1031 = vadd.f32 %v871, %v991
        %v1032 = vadd.f32 %v872, %v992
        %v1033 = vadd.f32 %v873, %v993
        %v1034 = vadd.f32 %v874, %v994
        %v1035 = vadd.f32 %v875, %v995
        %v1036 = vadd.f32 %v876, %v996
        %v1037 = vadd.f32 %v877, %v997
        %v1038 = vadd.f32 %v878, %v998
        %v1039 = vadd.f32 %v879, %v999
        %v1040 = vadd.f32 %v880, %v1000
        %v1041 = vadd.f32 %v881, %v1001
        %v1042 = vadd.f32 %v882, %v1002
        %v1043 = vadd.f32 %v883, %v1003
        %v1044 = vadd.f32 %v884, %v1004
        %v1045 = vadd.f32 %v885, %v1005
        %v1046 = vadd.f32 %v886, %v1006
        %v1047 = vadd.f32 %v887, %v1007
        %v1048 = vadd.f32 %v888, %v1008
        %v1049 = vadd.f32 %v889, %v1009
        %v1050 = vadd.f32 %v890, %v1010
        %v1051 = vadd.f32 %v891, %v1011
        %v1052 = vadd.f32 %v892, %v1012
        %v1053 = vadd.f32 %v893, %v1013
        %v1054 = vadd.f32 %v894, %v1014
        %v1055 = vadd.f32 %v895, %v1015
        %v1056 = vadd.f32 %v896, %v1016
        %v1057 = vadd.f32 %v897, %v1017
        %v1058 = vadd.f32 %v898, %v1018
        %v1059 = vadd.f32 %v899, %v1019
        %v1060 = vadd.f32 %v900, %v1020
        %v1061 = vadd.f32 %v901, %v1021
        %v1062 = vadd.f32 %v902, %v1022
        %v1063 = vadd.f32 %v903, %v1023
        %v1064 = vtanh.pop %v1024
        %v1065 = vtanh.pop %v1025
        %v1066 = vtanh.pop %v1026
        %v1067 = vtanh.pop %v1027
        %v1068 = vtanh.pop %v1028
        %v1069 = vtanh.pop %v1029
        %v1070 = vtanh.pop %v1030
        %v1071 = vtanh.pop %v1031
        %v1072 = vtanh.pop %v1032
        %v1073 = vtanh.pop %v1033
        %v1074 = vtanh.pop %v1034
        %v1075 = vtanh.pop %v1035
        %v1076 = vtanh.pop %v1036
        %v1077 = vtanh.pop %v1037
        %v1078 = vtanh.pop %v1038
        %v1079 = vtanh.pop %v1039
        %v1080 = vtanh.pop %v1040
        %v1081 = vtanh.pop %v1041
        %v1082 = vtanh.pop %v1042
        %v1083 = vtanh.pop %v1043
        %v1084 = vtanh.pop %v1044
        %v1085 = vtanh.pop %v1045
        %v1086 = vtanh.pop %v1046
        %v1087 = vtanh.pop %v1047
        %v1088 = vtanh.pop %v1048
        %v1089 = vtanh.pop %v1049
        %v1090 = vtanh.pop %v1050
        %v1091 = vtanh.pop %v1051
        %v1092 = vtanh.pop %v1052
        %v1093 = vtanh.pop %v1053
        %v1094 = vtanh.pop %v1054
        %v1095 = vtanh.pop %v1055
        %v1096 = vtanh.pop %v1056
        %v1097 = vtanh.pop %v1057
        %v1098 = vtanh.pop %v1058
        %v1099 = vtanh.pop %v1059
        %v1100 = vtanh.pop %v1060
        %v1101 = vtanh.pop %v1061
        %v1102 = vtanh.pop %v1062
        %v1103 = vtanh.pop %v1063
        %1144 = vrot.lane.b32.xlu0 %v1064, 1
        %v1145 = vpop.permute.xlu0 %1144
        %1146 = vrot.lane.b32.xlu0 %v1065, 1
        %v1147 = vpop.permute.xlu0 %1146
        %1148 = vrot.lane.b32.xlu0 %v1066, 1
        %v1149 = vpop.permute.xlu0 %1148
        %1150 = vrot.lane.b32.xlu0 %v1067, 1
        %v1151 = vpop.permute.xlu0 %1150
        %1152 = vrot.lane.b32.xlu0 %v1068, 1
        %v1153 = vpop.permute.xlu0 %1152
        %1154 = vrot.lane.b32.xlu0 %v1069, 1
        %v1155 = vpop.permute.xlu0 %1154
        %1156 = vrot.lane.b32.xlu0 %v1070, 1
        %v1157 = vpop.permute.xlu0 %1156
        %1158 = vrot.lane.b32.xlu0 %v1071, 1
        %v1159 = vpop.permute.xlu0 %1158
        %1160 = vrot.lane.b32.xlu0 %v1072, 1
        %v1161 = vpop.permute.xlu0 %1160
        %1162 = vrot.lane.b32.xlu0 %v1073, 1
        %v1163 = vpop.permute.xlu0 %1162
        %1164 = vrot.lane.b32.xlu0 %v1074, 1
        %v1165 = vpop.permute.xlu0 %1164
        %1166 = vrot.lane.b32.xlu0 %v1075, 1
        %v1167 = vpop.permute.xlu0 %1166
        %1168 = vrot.lane.b32.xlu0 %v1076, 1
        %v1169 = vpop.permute.xlu0 %1168
        %1170 = vrot.lane.b32.xlu0 %v1077, 1
        %v1171 = vpop.permute.xlu0 %1170
        %1172 = vrot.lane.b32.xlu0 %v1078, 1
        %v1173 = vpop.permute.xlu0 %1172
        %1174 = vrot.lane.b32.xlu0 %v1079, 1
        %v1175 = vpop.permute.xlu0 %1174
        %1176 = vrot.lane.b32.xlu0 %v1080, 1
        %v1177 = vpop.permute.xlu0 %1176
        %1178 = vrot.lane.b32.xlu0 %v1081, 1
        %v1179 = vpop.permute.xlu0 %1178
        %1180 = vrot.lane.b32.xlu0 %v1082, 1
        %v1181 = vpop.permute.xlu0 %1180
        %1182 = vrot.lane.b32.xlu0 %v1083, 1
        %v1183 = vpop.permute.xlu0 %1182
        %1184 = vrot.lane.b32.xlu0 %v1084, 1
        %v1185 = vpop.permute.xlu0 %1184
        %1186 = vrot.lane.b32.xlu0 %v1085, 1
        %v1187 = vpop.permute.xlu0 %1186
        %1188 = vrot.lane.b32.xlu0 %v1086, 1
        %v1189 = vpop.permute.xlu0 %1188
        %1190 = vrot.lane.b32.xlu0 %v1087, 1
        %v1191 = vpop.permute.xlu0 %1190
        %1192 = vrot.lane.b32.xlu0 %v1088, 1
        %v1193 = vpop.permute.xlu0 %1192
        %1194 = vrot.lane.b32.xlu0 %v1089, 1
        %v1195 = vpop.permute.xlu0 %1194
        %1196 = vrot.lane.b32.xlu0 %v1090, 1
        %v1197 = vpop.permute.xlu0 %1196
        %1198 = vrot.lane.b32.xlu0 %v1091, 1
        %v1199 = vpop.permute.xlu0 %1198
        %1200 = vrot.lane.b32.xlu0 %v1092, 1
        %v1201 = vpop.permute.xlu0 %1200
        %1202 = vrot.lane.b32.xlu0 %v1093, 1
        %v1203 = vpop.permute.xlu0 %1202
        %1204 = vrot.lane.b32.xlu0 %v1094, 1
        %v1205 = vpop.permute.xlu0 %1204
        %1206 = vrot.lane.b32.xlu0 %v1095, 1
        %v1207 = vpop.permute.xlu0 %1206
        %1208 = vrot.lane.b32.xlu0 %v1096, 1
        %v1209 = vpop.permute.xlu0 %1208
        %1210 = vrot.lane.b32.xlu0 %v1097, 1
        %v1211 = vpop.permute.xlu0 %1210
        %1212 = vrot.lane.b32.xlu0 %v1098, 1
        %v1213 = vpop.permute.xlu0 %1212
        %1214 = vrot.lane.b32.xlu0 %v1099, 1
        %v1215 = vpop.permute.xlu0 %1214
        %1216 = vrot.lane.b32.xlu0 %v1100, 1
        %v1217 = vpop.permute.xlu0 %1216
        %1218 = vrot.lane.b32.xlu0 %v1101, 1
        %v1219 = vpop.permute.xlu0 %1218
        %1220 = vrot.lane.b32.xlu0 %v1102, 1
        %v1221 = vpop.permute.xlu0 %1220
        %1222 = vrot.lane.b32.xlu0 %v1103, 1
        %v1223 = vpop.permute.xlu0 %1222
        %vm1264 = vcmask 138248
        %1265 = vst.msk [vmem:[%s192 + $0x1] sm:$0xff] %vm1264, %v1145
        %1266 = vst.msk [vmem:[%s192 + $0x9] sm:$0xff] %vm1264, %v1147
        %1267 = vst.msk [vmem:[%s192 + $0x19] sm:$0xff] %vm1264, %v1149
        %1268 = vst.msk [vmem:[%s192 + $0x21] sm:$0xff] %vm1264, %v1151
        %1269 = vst.msk [vmem:[%s192 + $0x31] sm:$0xff] %vm1264, %v1153
        %1270 = vst.msk [vmem:[%s192 + $0x39] sm:$0xff] %vm1264, %v1155
        %1271 = vst.msk [vmem:[%s192 + $0x49] sm:$0xff] %vm1264, %v1157
        %1272 = vst.msk [vmem:[%s192 + $0x51] sm:$0xff] %vm1264, %v1159
        %1273 = vst.msk [vmem:[%s192 + $0x61] sm:$0xff] %vm1264, %v1161
        %1274 = vst.msk [vmem:[%s192 + $0x69] sm:$0xff] %vm1264, %v1163
        %1275 = vst.msk [vmem:[%s192 + $0x79] sm:$0xff] %vm1264, %v1165
        %1276 = vst.msk [vmem:[%s192 + $0x81] sm:$0xff] %vm1264, %v1167
        %1277 = vst.msk [vmem:[%s192 + $0x91] sm:$0xff] %vm1264, %v1169
        %1278 = vst.msk [vmem:[%s192 + $0x99] sm:$0xff] %vm1264, %v1171
        %1279 = vst.msk [vmem:[%s192 + $0xa9] sm:$0xff] %vm1264, %v1173
        %1280 = vst.msk [vmem:[%s192 + $0xb1] sm:$0xff] %vm1264, %v1175
        %1281 = vst.msk [vmem:[%s192 + $0xc1] sm:$0xff] %vm1264, %v1177
        %1282 = vst.msk [vmem:[%s192 + $0xc9] sm:$0xff] %vm1264, %v1179
        %1283 = vst.msk [vmem:[%s192 + $0xd9] sm:$0xff] %vm1264, %v1181
        %1284 = vst.msk [vmem:[%s192 + $0xe1] sm:$0xff] %vm1264, %v1183
        %1285 = vst.msk [vmem:[%s192 + $0xf1] sm:$0xff] %vm1264, %v1185
        %1286 = vst.msk [vmem:[%s192 + $0xf9] sm:$0xff] %vm1264, %v1187
        %1287 = vst.msk [vmem:[%s192 + $0x109] sm:$0xff] %vm1264, %v1189
        %1288 = vst.msk [vmem:[%s192 + $0x111] sm:$0xff] %vm1264, %v1191
        %1289 = vst.msk [vmem:[%s192 + $0x121] sm:$0xff] %vm1264, %v1193
        %1290 = vst.msk [vmem:[%s192 + $0x129] sm:$0xff] %vm1264, %v1195
        %1291 = vst.msk [vmem:[%s192 + $0x139] sm:$0xff] %vm1264, %v1197
        %1292 = vst.msk [vmem:[%s192 + $0x141] sm:$0xff] %vm1264, %v1199
        %1293 = vst.msk [vmem:[%s192 + $0x151] sm:$0xff] %vm1264, %v1201
        %1294 = vst.msk [vmem:[%s192 + $0x159] sm:$0xff] %vm1264, %v1203
        %1295 = vst.msk [vmem:[%s192 + $0x169] sm:$0xff] %vm1264, %v1205
        %1296 = vst.msk [vmem:[%s192 + $0x171] sm:$0xff] %vm1264, %v1207
        %1297 = vst.msk [vmem:[%s192 + $0x181] sm:$0xff] %vm1264, %v1209
        %1298 = vst.msk [vmem:[%s192 + $0x189] sm:$0xff] %vm1264, %v1211
        %1299 = vst.msk [vmem:[%s192 + $0x199] sm:$0xff] %vm1264, %v1213
        %1300 = vst.msk [vmem:[%s192 + $0x1a1] sm:$0xff] %vm1264, %v1215
        %1301 = vst.msk [vmem:[%s192 + $0x1b1] sm:$0xff] %vm1264, %v1217
        %1302 = vst.msk [vmem:[%s192 + $0x1b9] sm:$0xff] %vm1264, %v1219
        %1303 = vst.msk [vmem:[%s192 + $0x1c9] sm:$0xff] %vm1264, %v1221
        %1304 = vst.msk [vmem:[%s192 + $0x1d1] sm:$0xff] %vm1264, %v1223
        %p1305 = scmp.lt.s32.totalorder %s17, 1
        %s1306 = scalar_select %p1305, %s17, 1
        %s1307 = smul.addr %s1306, 60
        %s1308 = smul.addr %s1307, 8
        %s1309 = scalar_lea.vmem %s3, %s1308
        // Predicated region
        $region37: #{tpu_custom_call.1} parent=31 // pred_check
          %p1310 = pneg %p103
        $region38: #{tpu_custom_call.1} parent=31 // pred_check_branch
          %1312 = sbr.rel (%p1310) target = $region40
        $region39: #{tpu_custom_call.1} parent=31 // pred_region
          _
        $region40: #{tpu_custom_call.1} parent=31 // pred_fallthru
          _
      $region32: #{tpu_custom_call.1} parent=5 // pred_fallthru
        _
      %p1313 = scmp.le.s32.totalorder 2, %s12
      // Predicated region
      $region41: #{tpu_custom_call.1} parent=5 // pred_check
        %p1314 = pneg %p1313
      $region42: #{tpu_custom_call.1} parent=5 // pred_check_branch
        %1316 = sbr.rel (%p1314) target = $region44
      $region43: #{tpu_custom_call.1} parent=5 // pred_region
        %s1317 = ssub.s32 %s12, 2
        // Predicated region
        $region45: #{tpu_custom_call.1} parent=43 // pred_check
          %p1318 = pneg %p109
        $region46: #{tpu_custom_call.1} parent=43 // pred_check_branch
          %1320 = sbr.rel (%p1318) target = $region48
        $region47: #{tpu_custom_call.1} parent=43 // pred_region
          %p1321 = scmp.lt.s32.totalorder %s18, 1
          %s1322 = scalar_select %p1321, %s18, 1
          %s1323 = smul.addr %s1322, 60
          %s1324 = smul.addr %s1323, 8
          %s1325 = scalar_lea.vmem %s3, %s1324
        $region48: #{tpu_custom_call.1} parent=43 // pred_fallthru
          _
      $region44: #{tpu_custom_call.1} parent=5 // pred_fallthru
        _
    $region6: #{tpu_custom_call.1} parent=1 // loop_footer
      %s16 = sadd.s32 1, %s12
    $region7: #{tpu_custom_call.1} parent=1 // loop_footer_branch
      %11 = sbr.rel target = $region3
    $region8: #{tpu_custom_call.1} parent=1 // loop_exit
      _
    %1326 = vsyncpa [#allocation3], 1
    %s1327 = scalar_lea.sflag [#allocation3], 1
    %1328 = vsyncpa %s1327, 1

</llo_original>
